<compile_context>
chip_gen: v6e
topology: v6e:2x2x1
jax: 0.10.0
libtpu: 0.0.40
codegen_flags: <defaults>
</compile_context>

<pallas_src>
import jax
import jax.numpy as jnp
from jax.experimental import pallas as pl
from jax.experimental.pallas import tpu as pltpu


# --------------------------------------------------------------------------
# tiling configuration
# --------------------------------------------------------------------------
TILE_M = 512            # A_hat row-tile cap ("parallel" axis -> megacore)
TILE_K = 1024           # reduction-tile cap over source nodes ("arbitrary" axis)
LANE = 128              # lane width; feature dims padded to a multiple of this
XW_RESIDENT_MAX_NODES = 16384   # keep the (n_pad, 128) bf16 XW resident in VMEM up to this


def _round_up(x, m):
    return ((x + m - 1) // m) * m


def _largest_aligned_divisor(n, cap):
    """Largest multiple of LANE that divides n and is <= cap (n is a multiple of LANE)."""
    best = LANE
    d = LANE
    top = min(cap, n)
    while d <= top:
        if n % d == 0:
            best = d
        d += LANE
    return best


def _choose_tiling(num_nodes):
    """n_pad decoupled from tile constants; tiles always divide n_pad exactly."""
    n_pad = _round_up(max(num_nodes, 1), LANE)
    # keep >= 2 row blocks when possible so the "parallel" axis uses both v7x TCs
    m_cap = min(TILE_M, n_pad if n_pad < 2 * LANE else n_pad // 2)
    tile_m = _largest_aligned_divisor(n_pad, max(m_cap, LANE))
    tile_k = _largest_aligned_divisor(n_pad, TILE_K)
    return n_pad, tile_m, tile_k


def _vmem_limit_bytes(n_pad, c_pad, tile_m, tile_k, xw_resident):
    a_buf = 2 * tile_m * tile_k * 2                                   # bf16 A tile, dbl-buffered
    xw_buf = (2 * n_pad * c_pad * 2) if xw_resident else (2 * tile_k * c_pad * 2)
    out_buf = 2 * tile_m * c_pad * 4                                  # f32 worst case
    acc_buf = tile_m * c_pad * 4
    par_buf = 2 * (c_pad * c_pad * 2 + c_pad * 4)                     # W_next + bias
    need = a_buf + xw_buf + out_buf + acc_buf + par_buf
    # generous headroom for Mosaic-internal scratch; >= 32 MiB (fixes v5e's 16 MiB
    # scoped default), capped at 48 MiB so v7x (64 MiB physical VMEM) keeps headroom
    return int(min(max(2 * need, 32 * 1024 * 1024), 48 * 1024 * 1024))


# --------------------------------------------------------------------------
# Pallas kernels
# --------------------------------------------------------------------------
def _make_agg_mid_kernel(tile_k, xw_resident):
    """Intermediate GCN layer, fully fused:

        acc  = sum_k A_hat[i, k] @ XW[k]        (bf16 MXU, f32 accumulate)
        z    = acc + b                          (f32, once, in finalize)
        h    = relu(z)                          (fused ReLU of the next block)
        out  = (h @ W_next).astype(bf16)        -> next layer's XW tile
    """
    def kernel(a_ref, xw_ref, b_ref, wn_ref, o_ref, acc_ref):
        kk = pl.program_id(1)

        @pl.when(kk == 0)
        def _():
            acc_ref[...] = jnp.zeros_like(acc_ref)

        if xw_resident:
            start = pl.multiple_of(kk * tile_k, tile_k)
            xw_blk = xw_ref[pl.ds(start, tile_k), :]
        else:
            xw_blk = xw_ref[...]

        acc_ref[...] += jnp.dot(a_ref[...], xw_blk, preferred_element_type=jnp.float32)

        @pl.when(kk == pl.num_programs(1) - 1)
        def _():
            z = acc_ref[...] + b_ref[...]            # bias once, f32
            h = jnp.maximum(z, 0.0)                  # ReLU of the next block
            o_ref[...] = jnp.dot(
                h.astype(jnp.bfloat16), wn_ref[...],
                preferred_element_type=jnp.float32,
            ).astype(o_ref.dtype)

    return kernel


def _make_agg_final_kernel(tile_k, xw_resident):
    """Last GCN layer: out = A_hat @ XW + b, accumulated directly in the f32
    output block (no scratch, no finalize copy)."""
    def kernel(a_ref, xw_ref, b_ref, o_ref):
        kk = pl.program_id(1)

        @pl.when(kk == 0)
        def _():
            o_ref[...] = jnp.zeros_like(o_ref) + b_ref[...]   # init with bias

        if xw_resident:
            start = pl.multiple_of(kk * tile_k, tile_k)
            xw_blk = xw_ref[pl.ds(start, tile_k), :]
        else:
            xw_blk = xw_ref[...]

        o_ref[...] += jnp.dot(a_ref[...], xw_blk, preferred_element_type=jnp.float32)

    return kernel


# --------------------------------------------------------------------------
# pallas_call wrappers
# --------------------------------------------------------------------------
def _xw_spec(n_pad, c_pad, tile_k, xw_resident):
    if xw_resident:
        # full array, constant block index -> DMA'd once, resident across the grid
        return pl.BlockSpec((n_pad, c_pad), lambda i, k: (0, 0))
    return pl.BlockSpec((tile_k, c_pad), lambda i, k: (k, 0))


def gcn_agg_mid(a_hat, xw, bias, w_next, *, n_pad, c_pad, tile_m, tile_k,
                xw_resident, vmem_limit):
    grid = (n_pad // tile_m, n_pad // tile_k)
    return pl.pallas_call(
        _make_agg_mid_kernel(tile_k, xw_resident),
        out_shape=jax.ShapeDtypeStruct((n_pad, c_pad), jnp.bfloat16),
        grid_spec=pltpu.PrefetchScalarGridSpec(
            num_scalar_prefetch=0,
            grid=grid,
            in_specs=[
                pl.BlockSpec((tile_m, tile_k), lambda i, k: (i, k)),     # A_hat (bf16)
                _xw_spec(n_pad, c_pad, tile_k, xw_resident),             # XW (bf16)
                pl.BlockSpec((1, c_pad), lambda i, k: (0, 0)),           # bias (f32)
                pl.BlockSpec((c_pad, c_pad), lambda i, k: (0, 0)),       # W_next (bf16)
            ],
            out_specs=pl.BlockSpec((tile_m, c_pad), lambda i, k: (i, 0)),
            scratch_shapes=[pltpu.VMEM((tile_m, c_pad), jnp.float32)],
        ),
        compiler_params=pltpu.CompilerParams(
            dimension_semantics=("parallel", "arbitrary"),
            vmem_limit_bytes=vmem_limit),
    )(a_hat, xw, bias, w_next)


def gcn_agg_final(a_hat, xw, bias, *, n_pad, c_pad, tile_m, tile_k,
                  xw_resident, vmem_limit):
    grid = (n_pad // tile_m, n_pad // tile_k)
    return pl.pallas_call(
        _make_agg_final_kernel(tile_k, xw_resident),
        out_shape=jax.ShapeDtypeStruct((n_pad, c_pad), jnp.float32),
        grid_spec=pltpu.PrefetchScalarGridSpec(
            num_scalar_prefetch=0,
            grid=grid,
            in_specs=[
                pl.BlockSpec((tile_m, tile_k), lambda i, k: (i, k)),     # A_hat (bf16)
                _xw_spec(n_pad, c_pad, tile_k, xw_resident),             # XW (bf16)
                pl.BlockSpec((1, c_pad), lambda i, k: (0, 0)),           # bias (f32)
            ],
            out_specs=pl.BlockSpec((tile_m, c_pad), lambda i, k: (i, 0)),
        ),
        compiler_params=pltpu.CompilerParams(
            dimension_semantics=("parallel", "arbitrary"),
            vmem_limit_bytes=vmem_limit),
    )(a_hat, xw, bias)


# --------------------------------------------------------------------------
# glue (plain JAX): normalized adjacency, parameter init, forward wrapper
# --------------------------------------------------------------------------
def build_norm_adj_padded(edge_index, num_nodes, n_pad, dtype=jnp.bfloat16):
    """Dense D^{-1/2}(A + I)D^{-1/2}, scattered straight into the padded buffer.

    edge_index[0] = source nodes, edge_index[1] = target nodes.
    A_hat[target, source] = deg^{-1/2}[src] * deg^{-1/2}[tgt].
    NOTE: duplicate edges accumulate (matches torch_geometric only for
    coalesced edge_index).
    """
    loop = jnp.arange(num_nodes, dtype=edge_index.dtype)
    row = jnp.concatenate([edge_index[0], loop])  # source
    col = jnp.concatenate([edge_index[1], loop])  # target
    deg = jnp.zeros((num_nodes,), jnp.float32).at[col].add(1.0)
    deg_inv_sqrt = jnp.where(deg > 0, jax.lax.rsqrt(deg), 0.0)
    norm = deg_inv_sqrt[row] * deg_inv_sqrt[col]
    a_hat = jnp.zeros((n_pad, n_pad), jnp.float32).at[col, row].add(norm)
    return a_hat.astype(dtype)


def xavier_uniform(key, shape):
    fan_in, fan_out = shape
    limit = jnp.sqrt(6.0 / (fan_in + fan_out))
    return jax.random.uniform(key, shape, jnp.float32, -limit, limit)


def init_params(key, config):
    type_dim, dim = config["type_dim"], config["dim"]
    out_c, num_layer = config["out_channels"], config["num_layer"]

    keys = jax.random.split(key, 2 + 2 * num_layer)
    params = {}
    params["w_embed"] = xavier_uniform(keys[0], (type_dim, dim))          # bias=False
    params["conv_w"] = [xavier_uniform(keys[1], (dim, out_c))]            # conv1
    params["conv_b"] = [jnp.zeros((1, out_c), jnp.float32)]
    for i in range(num_layer - 1):
        params["conv_w"].append(xavier_uniform(keys[2 + i], (out_c, out_c)))
        params["conv_b"].append(
            0.01 * jax.random.normal(keys[2 + num_layer + i], (1, out_c), jnp.float32))
    return params


def gcn2_forward(params, x, edge_index, num_nodes, force_stream_xw=False):
    type_dim = x.shape[1]
    c_out = params["conv_w"][0].shape[1]
    num_layer = len(params["conv_w"])

    n_pad, tile_m, tile_k = _choose_tiling(num_nodes)
    c_pad = _round_up(c_out, LANE)
    xw_resident = (not force_stream_xw) and (n_pad <= XW_RESIDENT_MAX_NODES)
    vmem_limit = _vmem_limit_bytes(n_pad, c_pad, tile_m, tile_k, xw_resident)

    # normalized adjacency scattered straight into the padded bf16 buffer
    a_hat = build_norm_adj_padded(edge_index, num_nodes, n_pad, jnp.bfloat16)

    # Fuse the bias-free embedding into conv1:  A@((x@We)@W1) == A@(x@(We@W1)).
    # type_dim (8) is far below one lane, so this tiny GEMM stays in plain XLA.
    w_eff = params["w_embed"] @ params["conv_w"][0]                       # (type_dim, c_out)
    xw = x @ w_eff                                                        # (N, c_out) f32
    xw = jnp.pad(xw, ((0, n_pad - num_nodes), (0, c_pad - c_out))).astype(jnp.bfloat16)

    biases = [jnp.pad(b, ((0, 0), (0, c_pad - c_out))) for b in params["conv_b"]]
    w_next = [
        jnp.pad(w, ((0, c_pad - w.shape[0]), (0, c_pad - w.shape[1]))).astype(jnp.bfloat16)
        for w in params["conv_w"][1:]
    ]

    # layers 1 .. L-1: aggregation + bias + ReLU + next transform, fused
    for li in range(num_layer - 1):
        xw = gcn_agg_mid(a_hat, xw, biases[li], w_next[li],
                         n_pad=n_pad, c_pad=c_pad, tile_m=tile_m, tile_k=tile_k,
                         xw_resident=xw_resident, vmem_limit=vmem_limit)

    # final layer: aggregation + bias, f32, then slice padding off
    out = gcn_agg_final(a_hat, xw, biases[num_layer - 1],
                        n_pad=n_pad, c_pad=c_pad, tile_m=tile_m, tile_k=tile_k,
                        xw_resident=xw_resident, vmem_limit=vmem_limit)
    return out[:num_nodes, :c_out]


def reference_forward(params, x, edge_index, num_nodes):
    """Pure-JAX f32 reference of the same forward (eval mode)."""
    a_hat = build_norm_adj_padded(edge_index, num_nodes, num_nodes, jnp.float32)
    h = x @ params["w_embed"]
    h = a_hat @ (h @ params["conv_w"][0]) + params["conv_b"][0]
    for w, b in zip(params["conv_w"][1:], params["conv_b"][1:]):
        h = a_hat @ (jnp.maximum(h, 0.0) @ w) + b
    return h


# --------------------------------------------------------------------------
# main
# --------------------------------------------------------------------------
if __name__ == "__main__":
    config = {
        "num_node": None,        # -> use linear type embedding path
        "use_type_info": True,
        "type_dim": 8,
        "dim": 32,
        "hidden_channels": 32,
        "out_channels": 16,
        "num_layer": 3,          # conv1 + 2 extra (ReLU, Dropout, GCNConv) blocks
        "dropout": 0.1,          # identity at inference
    }

    key = jax.random.PRNGKey(0)
    k_p, k_small, k_big = jax.random.split(key, 3)
    params = init_params(k_p, config)

    def make_graph(k, n, e):
        kx, ke = jax.random.split(k)
        xg = jax.random.normal(kx, (n, config["type_dim"]), jnp.float32)
        ei = jax.random.randint(ke, (2, e), 0, n, jnp.int32)
        return xg, ei

    # (name, num_nodes, num_edges, force streamed-XW fallback path)
    cases = [
        ("small_single_block", 16, 40, False),     # n_pad=128, 1x1 grid, resident XW
        ("tiled_resident_xw", 1200, 4800, False),  # multi row/k blocks, resident XW
        ("tiled_streamed_xw", 1200, 4800, True),   # streamed XW tiles fallback
    ]

    for name, n, e, force_stream in cases:
        kk = k_small if n == 16 else k_big
        x, edge_index = make_graph(kk, n, e)
        out = gcn2_forward(params, x, edge_index, n, force_stream_xw=force_stream)
        out = jax.block_until_ready(out)

        assert out.shape == (n, config["out_channels"]), (name, out.shape)
        assert bool(jnp.all(jnp.isfinite(out))), name

        # sanity check vs. pure f32 reference (loose tolerance: A_hat / XW are
        # bf16 MXU inputs, accumulation is f32)
        ref = reference_forward(params, x, edge_index, n)
        err = float(jnp.max(jnp.abs(out - ref)))
        assert bool(jnp.allclose(out, ref, rtol=0.1, atol=0.1)), (name, err)

    print("KERNEL_OK")
</pallas_src>

<mosaic_0001>
module attributes {stable_mosaic.version = 11 : i64} {
  func.func @kernel(%arg0: i32, %arg1: i32, %arg2: memref<128x128xbf16, #tpu.memory_space<vmem>>, %arg3: memref<128x128xbf16, #tpu.memory_space<vmem>>, %arg4: memref<1x128xf32, #tpu.memory_space<vmem>>, %arg5: memref<128x128xbf16, #tpu.memory_space<vmem>>, %arg6: memref<128x128xbf16, #tpu.memory_space<vmem>>, %arg7: memref<128x128xf32, #tpu.memory_space<vmem>>) attributes {dimension_semantics = [#tpu.dimension_semantics<parallel>, #tpu.dimension_semantics<arbitrary>], iteration_bounds = array<i64: 1, 1>, scalar_prefetch = 0 : i64, scratch_operands = 1 : i64, tpu.core_type = #tpu.core_type<tc>, window_params = [{transform_indices = @transform_0, window_bounds = array<i64: 128, 128>}, {pipeline_mode = #tpu.pipeline_mode<synchronous>, transform_indices = @transform_1, window_bounds = array<i64: 128, 128>}, {pipeline_mode = #tpu.pipeline_mode<synchronous>, transform_indices = @transform_2, window_bounds = array<i64: 1, 128>}, {pipeline_mode = #tpu.pipeline_mode<synchronous>, transform_indices = @transform_3, window_bounds = array<i64: 128, 128>}, {transform_indices = @transform_4, window_bounds = array<i64: 128, 128>}]} {
    %c0_i32 = arith.constant 0 : i32
    %0 = arith.cmpi eq, %arg1, %c0_i32 : i32
    %1 = arith.extui %0 : i1 to i32
    %c0_i32_0 = arith.constant 0 : i32
    %2 = arith.cmpi ne, %1, %c0_i32_0 : i32
    scf.if %2 {
      %cst_9 = arith.constant 0.000000e+00 : f32
      %15 = vector.broadcast %cst_9 : f32 to vector<128x128xf32>
      %c0_10 = arith.constant 0 : index
      %c0_11 = arith.constant 0 : index
      %16 = vector.load %arg7[%c0_10, %c0_11] : memref<128x128xf32, #tpu.memory_space<vmem>>, vector<128x128xf32>
      tpu.vector_store %arg7[%c0_10, %c0_11], %15 {strides = array<i32>} : memref<128x128xf32, #tpu.memory_space<vmem>>, vector<128x128xf32>,
    } else {
    }
    %c128_i32 = arith.constant 128 : i32
    %3 = arith.muli %arg1, %c128_i32 : i32
    %4 = tpu.assume_multiple %3, 128 : i32
    %5 = arith.index_cast %4 : i32 to index
    %c0 = arith.constant 0 : index
    %6 = vector.load %arg3[%5, %c0] : memref<128x128xbf16, #tpu.memory_space<vmem>>, vector<128x128xbf16>
    %c0_1 = arith.constant 0 : index
    %c0_2 = arith.constant 0 : index
    %7 = vector.load %arg7[%c0_1, %c0_2] : memref<128x128xf32, #tpu.memory_space<vmem>>, vector<128x128xf32>
    %c0_3 = arith.constant 0 : index
    %c0_4 = arith.constant 0 : index
    %8 = vector.load %arg2[%c0_3, %c0_4] : memref<128x128xbf16, #tpu.memory_space<vmem>>, vector<128x128xbf16>
    %cst = arith.constant dense<0.000000e+00> : vector<128x128xf32>
    %9 = tpu.matmul %8, %6, %cst {dimension_numbers = #tpu.dot_dimension_numbers<[1], [0], [0], [1], [0, 0, 1, 1], [], []>} : vector<128x128xbf16>, vector<128x128xbf16>, vector<128x128xf32> -> vector<128x128xf32>
    %10 = arith.addf %7, %9 : vector<128x128xf32>
    %c0_5 = arith.constant 0 : index
    %c0_6 = arith.constant 0 : index
    %11 = vector.load %arg7[%c0_5, %c0_6] : memref<128x128xf32, #tpu.memory_space<vmem>>, vector<128x128xf32>
    tpu.vector_store %arg7[%c0_5, %c0_6], %10 {strides = array<i32>} : memref<128x128xf32, #tpu.memory_space<vmem>>, vector<128x128xf32>,
    %c0_i32_7 = arith.constant 0 : i32
    %12 = arith.cmpi eq, %arg1, %c0_i32_7 : i32
    %13 = arith.extui %12 : i1 to i32
    %c0_i32_8 = arith.constant 0 : i32
    %14 = arith.cmpi ne, %13, %c0_i32_8 : i32
    scf.if %14 {
      %c0_9 = arith.constant 0 : index
      %c0_10 = arith.constant 0 : index
      %15 = vector.load %arg7[%c0_9, %c0_10] : memref<128x128xf32, #tpu.memory_space<vmem>>, vector<128x128xf32>
      %c0_11 = arith.constant 0 : index
      %c0_12 = arith.constant 0 : index
      %16 = vector.load %arg4[%c0_11, %c0_12] : memref<1x128xf32, #tpu.memory_space<vmem>>, vector<1x128xf32>
      %17 = vector.broadcast %16 : vector<1x128xf32> to vector<128x128xf32>
      %18 = arith.addf %15, %17 : vector<128x128xf32>
      %cst_13 = arith.constant 0.000000e+00 : f32
      %19 = vector.broadcast %cst_13 : f32 to vector<128x128xf32>
      %20 = arith.maximumf %18, %19 : vector<128x128xf32>
      %21 = arith.truncf %20 : vector<128x128xf32> to vector<128x128xbf16>
      %c0_14 = arith.constant 0 : index
      %c0_15 = arith.constant 0 : index
      %22 = vector.load %arg5[%c0_14, %c0_15] : memref<128x128xbf16, #tpu.memory_space<vmem>>, vector<128x128xbf16>
      %cst_16 = arith.constant dense<0.000000e+00> : vector<128x128xf32>
      %23 = tpu.matmul %21, %22, %cst_16 {dimension_numbers = #tpu.dot_dimension_numbers<[1], [0], [0], [1], [0, 0, 1, 1], [], []>} : vector<128x128xbf16>, vector<128x128xbf16>, vector<128x128xf32> -> vector<128x128xf32>
      %24 = arith.truncf %23 : vector<128x128xf32> to vector<128x128xbf16>
      %c0_17 = arith.constant 0 : index
      %c0_18 = arith.constant 0 : index
      %25 = vector.load %arg6[%c0_17, %c0_18] : memref<128x128xbf16, #tpu.memory_space<vmem>>, vector<128x128xbf16>
      tpu.vector_store %arg6[%c0_17, %c0_18], %24 {strides = array<i32>} : memref<128x128xbf16, #tpu.memory_space<vmem>>, vector<128x128xbf16>,
    } else {
    }
    return
  }
  func.func @transform_0(%arg0: i32, %arg1: i32) -> (i32, i32) {
    %c0_i32 = arith.constant 0 : i32
    return %arg0, %arg1 : i32, i32
  }
  func.func @transform_1(%arg0: i32, %arg1: i32) -> (i32, i32) {
    %c0_i32 = arith.constant 0 : i32
    %c0_i32_0 = arith.constant 0 : i32
    %c0_i32_1 = arith.constant 0 : i32
    return %c0_i32, %c0_i32_0 : i32, i32
  }
  func.func @transform_2(%arg0: i32, %arg1: i32) -> (i32, i32) {
    %c0_i32 = arith.constant 0 : i32
    %c0_i32_0 = arith.constant 0 : i32
    %c0_i32_1 = arith.constant 0 : i32
    return %c0_i32, %c0_i32_0 : i32, i32
  }
  func.func @transform_3(%arg0: i32, %arg1: i32) -> (i32, i32) {
    %c0_i32 = arith.constant 0 : i32
    %c0_i32_0 = arith.constant 0 : i32
    %c0_i32_1 = arith.constant 0 : i32
    return %c0_i32, %c0_i32_0 : i32, i32
  }
  func.func @transform_4(%arg0: i32, %arg1: i32) -> (i32, i32) {
    %c0_i32 = arith.constant 0 : i32
    %c0_i32_0 = arith.constant 0 : i32
    return %arg0, %c0_i32 : i32, i32
  }
}

</mosaic_0001>

<llo_original>
// kernel: tpu_custom_call.1
$region0: #{tpu_custom_call.1}
  #allocation0 [shape = 'u32[]', space=smem, size = 0x4, offset = 0x4, fixed_abs, tag = 'smem constant byte address 0x4 - core index']
  #allocation1 [shape = 'u32[144,128]{1,0:T(1,128)}', space=vmem, size = 0x12000, scoped, tag = 'internal scratch']
  #allocation2 [shape = 'f32[128,128]{1,0:T(8,128)}', space=vmem, size = 0x10000, scoped, tag = 'scratch operand']
  %s0 = inlined_call_operand.hbm [shape: bf16[128,128], index: 0, kind: input, shape index: {}]
  %s1 = inlined_call_operand.hbm [shape: bf16[128,128], index: 1, kind: input, shape index: {}]
  %s2 = inlined_call_operand.vmem [shape: f32[1,128], index: 2, kind: input, shape index: {}]
  %s3 = inlined_call_operand.hbm [shape: bf16[128,128], index: 3, kind: input, shape index: {}]
  %s4 = inlined_call_operand.hbm [shape: bf16[128,128], index: 4, kind: output, shape index: {}]
  %s5 = sld [smem:[#allocation0]]
  $region46: #{tpu_custom_call.1} parent=0
    _
  %s7 = ssub.s32 1, %s5
  %s8 = scalar_select 0, %s7, %s5
  $region1: #{tpu_custom_call.1} parent=0
    #allocation3 [shape = 'u8[32768]{0}', space=vmem, size = 0x8000, scoped, tag = 'input window, operand 0, single buffered']
    #allocation4 [shape = 's32[1]{0}', space=sflag, size = 0x4, scoped, tag = 'scoped memory for tpu_custom_call.1']
    #allocation5 [shape = 's32[1]{0}', space=sflag, size = 0x4, scoped, tag = 'scoped memory for tpu_custom_call.1']
    #allocation6 [shape = 'u8[32768]{0}', space=vmem, size = 0x8000, scoped, tag = 'input window, operand 1, single buffered']
    #allocation7 [shape = 's32[1]{0}', space=sflag, size = 0x4, scoped, tag = 'scoped memory for tpu_custom_call.1']
    #allocation8 [shape = 'u8[32768]{0}', space=vmem, size = 0x8000, scoped, tag = 'input window, operand 3, single buffered']
    #allocation9 [shape = 'u8[32768]{0}', space=vmem, size = 0x8000, scoped, tag = 'output window, operand 0, single buffered']
    %9 = vsyncpa [#allocation4], 0
    %10 = vsyncpa [#allocation7], 0
    %11 = vsyncpa [#allocation5], 0
    // Predicated region
    $region2: #{tpu_custom_call.1} parent=1 // pred_check
      _
    $region3: #{tpu_custom_call.1} parent=1 // pred_check_branch
      %13 = sbr.rel (0) target = $region5
    $region4: #{tpu_custom_call.1} parent=1 // pred_region
      %s15 = ssub.s32 1024, 1024
      %16 = vsyncadd [#allocation4], %s15
      %s17 = sshll.u32 [#allocation3], 4
      %s18 = int_to_ptr.vmem [resolvable:$true] %s17
      %23 = dma.hbm_to_vmem [thread:$0]  %s0, 1024, %s18, [#allocation4], 64, 64, 4
    $region5: #{tpu_custom_call.1} parent=1 // pred_fallthru
      _
    // Predicated region
    $region6: #{tpu_custom_call.1} parent=1 // pred_check
      _
    $region7: #{tpu_custom_call.1} parent=1 // pred_check_branch
      %25 = sbr.rel (0) target = $region9
    $region8: #{tpu_custom_call.1} parent=1 // pred_region
      %s27 = ssub.s32 1024, 1024
      %28 = vsyncadd [#allocation7], %s27
      %s29 = sshll.u32 [#allocation6], 4
      %s30 = int_to_ptr.vmem [resolvable:$true] %s29
      %35 = dma.hbm_to_vmem [thread:$0]  %s1, 1024, %s30, [#allocation7], 64, 64, 4
    $region9: #{tpu_custom_call.1} parent=1 // pred_fallthru
      _
    // Predicated region
    $region10: #{tpu_custom_call.1} parent=1 // pred_check
      _
    $region11: #{tpu_custom_call.1} parent=1 // pred_check_branch
      %37 = sbr.rel (0) target = $region13
    $region12: #{tpu_custom_call.1} parent=1 // pred_region
      _
    $region13: #{tpu_custom_call.1} parent=1 // pred_fallthru
      _
    // Predicated region
    $region14: #{tpu_custom_call.1} parent=1 // pred_check
      _
    $region15: #{tpu_custom_call.1} parent=1 // pred_check_branch
      %39 = sbr.rel (0) target = $region17
    $region16: #{tpu_custom_call.1} parent=1 // pred_region
      %s41 = ssub.s32 1024, 1024
      %42 = vsyncadd [#allocation7], %s41
      %s43 = sshll.u32 [#allocation8], 4
      %s44 = int_to_ptr.vmem [resolvable:$true] %s43
      %49 = dma.hbm_to_vmem [thread:$0]  %s3, 1024, %s44, [#allocation7], 64, 64, 4
    $region17: #{tpu_custom_call.1} parent=1 // pred_fallthru
      _
    // Predicated region
    $region18: #{tpu_custom_call.1} parent=1 // pred_check
      _
    $region19: #{tpu_custom_call.1} parent=1 // pred_check_branch
      %51 = sbr.rel (0) target = $region21
    $region20: #{tpu_custom_call.1} parent=1 // pred_region
      %52 = dma.done [#allocation4], 1024
    $region21: #{tpu_custom_call.1} parent=1 // pred_fallthru
      _
    // Predicated region
    $region22: #{tpu_custom_call.1} parent=1 // pred_check
      _
    $region23: #{tpu_custom_call.1} parent=1 // pred_check_branch
      %54 = sbr.rel (0) target = $region25
    $region24: #{tpu_custom_call.1} parent=1 // pred_region
      %55 = dma.done [#allocation7], 1024
    $region25: #{tpu_custom_call.1} parent=1 // pred_fallthru
      _
    // Predicated region
    $region26: #{tpu_custom_call.1} parent=1 // pred_check
      _
    $region27: #{tpu_custom_call.1} parent=1 // pred_check_branch
      %57 = sbr.rel (0) target = $region29
    $region28: #{tpu_custom_call.1} parent=1 // pred_region
      %58 = dma.done [#allocation7], 1024
    $region29: #{tpu_custom_call.1} parent=1 // pred_fallthru
      _
    %p60 = scmp.eq.s32.totalorder 0, 0
    // Predicated region
    $region30: #{tpu_custom_call.1} parent=1 // pred_check
      %p61 = pneg %p60
    $region31: #{tpu_custom_call.1} parent=1 // pred_check_branch
      %63 = sbr.rel (%p61) target = $region33
    $region32: #{tpu_custom_call.1} parent=1 // pred_region
      %64 = vst [vmem:[#allocation2] sm:$0xff] 0.0
      %65 = vst [vmem:[#allocation2 + $0x8] sm:$0xff] 0.0
      %66 = vst [vmem:[#allocation2 + $0x10] sm:$0xff] 0.0
      %67 = vst [vmem:[#allocation2 + $0x18] sm:$0xff] 0.0
      %68 = vst [vmem:[#allocation2 + $0x20] sm:$0xff] 0.0
      %69 = vst [vmem:[#allocation2 + $0x28] sm:$0xff] 0.0
      %70 = vst [vmem:[#allocation2 + $0x30] sm:$0xff] 0.0
      %71 = vst [vmem:[#allocation2 + $0x38] sm:$0xff] 0.0
      %72 = vst [vmem:[#allocation2 + $0x40] sm:$0xff] 0.0
      %73 = vst [vmem:[#allocation2 + $0x48] sm:$0xff] 0.0
      %74 = vst [vmem:[#allocation2 + $0x50] sm:$0xff] 0.0
      %75 = vst [vmem:[#allocation2 + $0x58] sm:$0xff] 0.0
      %76 = vst [vmem:[#allocation2 + $0x60] sm:$0xff] 0.0
      %77 = vst [vmem:[#allocation2 + $0x68] sm:$0xff] 0.0
      %78 = vst [vmem:[#allocation2 + $0x70] sm:$0xff] 0.0
      %79 = vst [vmem:[#allocation2 + $0x78] sm:$0xff] 0.0
    $region33: #{tpu_custom_call.1} parent=1 // pred_fallthru
      _
    %s80 = smul.u32 0, 128
    %s81 = sshra.s32 %s80, 3
    %s82 = sand.u32 %s80, 7
    %s83 = smul.addr %s81, 4
    %s84 = scalar_lea.vmem [#allocation6], %s83
    %v85 = vld [vmem:[%s84] sm:$0xf]
    %v86 = vld [vmem:[%s84 + $0x4] sm:$0xf]
    %v87 = vld [vmem:[%s84 + $0x8] sm:$0xf]
    %v88 = vld [vmem:[%s84 + $0xc] sm:$0xf]
    %v89 = vld [vmem:[%s84 + $0x10] sm:$0xf]
    %v90 = vld [vmem:[%s84 + $0x14] sm:$0xf]
    %v91 = vld [vmem:[%s84 + $0x18] sm:$0xf]
    %v92 = vld [vmem:[%s84 + $0x1c] sm:$0xf]
    %v93 = vld [vmem:[%s84 + $0x20] sm:$0xf]
    %v94 = vld [vmem:[%s84 + $0x24] sm:$0xf]
    %v95 = vld [vmem:[%s84 + $0x28] sm:$0xf]
    %v96 = vld [vmem:[%s84 + $0x2c] sm:$0xf]
    %v97 = vld [vmem:[%s84 + $0x30] sm:$0xf]
    %v98 = vld [vmem:[%s84 + $0x34] sm:$0xf]
    %v99 = vld [vmem:[%s84 + $0x38] sm:$0xf]
    %v100 = vld [vmem:[%s84 + $0x3c] sm:$0xf]
    %v101 = vld [vmem:[#allocation2] sm:$0xff]
    %v102 = vld [vmem:[#allocation2 + $0x8] sm:$0xff]
    %v103 = vld [vmem:[#allocation2 + $0x10] sm:$0xff]
    %v104 = vld [vmem:[#allocation2 + $0x18] sm:$0xff]
    %v105 = vld [vmem:[#allocation2 + $0x20] sm:$0xff]
    %v106 = vld [vmem:[#allocation2 + $0x28] sm:$0xff]
    %v107 = vld [vmem:[#allocation2 + $0x30] sm:$0xff]
    %v108 = vld [vmem:[#allocation2 + $0x38] sm:$0xff]
    %v109 = vld [vmem:[#allocation2 + $0x40] sm:$0xff]
    %v110 = vld [vmem:[#allocation2 + $0x48] sm:$0xff]
    %v111 = vld [vmem:[#allocation2 + $0x50] sm:$0xff]
    %v112 = vld [vmem:[#allocation2 + $0x58] sm:$0xff]
    %v113 = vld [vmem:[#allocation2 + $0x60] sm:$0xff]
    %v114 = vld [vmem:[#allocation2 + $0x68] sm:$0xff]
    %v115 = vld [vmem:[#allocation2 + $0x70] sm:$0xff]
    %v116 = vld [vmem:[#allocation2 + $0x78] sm:$0xff]
    %v117 = vld [vmem:[#allocation3] sm:$0xf]
    %v118 = vld [vmem:[#allocation3 + $0x4] sm:$0xf]
    %v119 = vld [vmem:[#allocation3 + $0x8] sm:$0xf]
    %v120 = vld [vmem:[#allocation3 + $0xc] sm:$0xf]
    %v121 = vld [vmem:[#allocation3 + $0x10] sm:$0xf]
    %v122 = vld [vmem:[#allocation3 + $0x14] sm:$0xf]
    %v123 = vld [vmem:[#allocation3 + $0x18] sm:$0xf]
    %v124 = vld [vmem:[#allocation3 + $0x1c] sm:$0xf]
    %v125 = vld [vmem:[#allocation3 + $0x20] sm:$0xf]
    %v126 = vld [vmem:[#allocation3 + $0x24] sm:$0xf]
    %v127 = vld [vmem:[#allocation3 + $0x28] sm:$0xf]
    %v128 = vld [vmem:[#allocation3 + $0x2c] sm:$0xf]
    %v129 = vld [vmem:[#allocation3 + $0x30] sm:$0xf]
    %v130 = vld [vmem:[#allocation3 + $0x34] sm:$0xf]
    %v131 = vld [vmem:[#allocation3 + $0x38] sm:$0xf]
    %v132 = vld [vmem:[#allocation3 + $0x3c] sm:$0xf]
    %v149 = vunpack.c.l.b16 %v117
    %v150 = vunpack.c.l.b16 %v118
    %v151 = vunpack.c.l.b16 %v119
    %v152 = vunpack.c.l.b16 %v120
    %v153 = vunpack.c.l.b16 %v121
    %v154 = vunpack.c.l.b16 %v122
    %v155 = vunpack.c.l.b16 %v123
    %v156 = vunpack.c.l.b16 %v124
    %v157 = vunpack.c.l.b16 %v125
    %v158 = vunpack.c.l.b16 %v126
    %v159 = vunpack.c.l.b16 %v127
    %v160 = vunpack.c.l.b16 %v128
    %v161 = vunpack.c.l.b16 %v129
    %v162 = vunpack.c.l.b16 %v130
    %v163 = vunpack.c.l.b16 %v131
    %v164 = vunpack.c.l.b16 %v132
    %v165 = vpack.c.b16 %v150, %v149
    %v166 = vpack.c.b16 %v152, %v151
    %v167 = vpack.c.b16 %v154, %v153
    %v168 = vpack.c.b16 %v156, %v155
    %v169 = vpack.c.b16 %v158, %v157
    %v170 = vpack.c.b16 %v160, %v159
    %v171 = vpack.c.b16 %v162, %v161
    %v172 = vpack.c.b16 %v164, %v163
    %v197 = vunpack.c.l.b16 %v85
    %v198 = vunpack.c.l.b16 %v86
    %v199 = vunpack.c.l.b16 %v87
    %v200 = vunpack.c.l.b16 %v88
    %v201 = vunpack.c.l.b16 %v89
    %v202 = vunpack.c.l.b16 %v90
    %v203 = vunpack.c.l.b16 %v91
    %v204 = vunpack.c.l.b16 %v92
    %v205 = vunpack.c.l.b16 %v93
    %v206 = vunpack.c.l.b16 %v94
    %v207 = vunpack.c.l.b16 %v95
    %v208 = vunpack.c.l.b16 %v96
    %v209 = vunpack.c.l.b16 %v97
    %v210 = vunpack.c.l.b16 %v98
    %v211 = vunpack.c.l.b16 %v99
    %v212 = vunpack.c.l.b16 %v100
    %v213 = vpack.c.b16 %v198, %v197
    %v214 = vpack.c.b16 %v200, %v199
    %v215 = vpack.c.b16 %v202, %v201
    %v216 = vpack.c.b16 %v204, %v203
    %v217 = vpack.c.b16 %v206, %v205
    %v218 = vpack.c.b16 %v208, %v207
    %v219 = vpack.c.b16 %v210, %v209
    %v220 = vpack.c.b16 %v212, %v211
    %229 = vmatprep.subr.bf16.mxu0 0
    %230 = vmatpush1.bf16.msra.mxu0 %v220
    %231 = vmatprep.subr.bf16.mxu0 0
    %232 = vmatpush1.bf16.msra.mxu0 %v219
    %233 = vmatprep.subr.bf16.mxu0 0
    %234 = vmatpush1.bf16.msra.mxu0 %v218
    %235 = vmatprep.subr.bf16.mxu0 0
    %236 = vmatpush1.bf16.msra.mxu0 %v217
    %237 = vmatprep.subr.bf16.mxu0 0
    %238 = vmatpush1.bf16.msra.mxu0 %v216
    %239 = vmatprep.subr.bf16.mxu0 0
    %240 = vmatpush1.bf16.msra.mxu0 %v215
    %241 = vmatprep.subr.bf16.mxu0 0
    %242 = vmatpush1.bf16.msra.mxu0 %v214
    %243 = vmatprep.subr.bf16.mxu0 0
    %244 = vmatpush1.bf16.msra.mxu0 %v213
    %245 = vmatprep.subr.bf16.mxu0 0
    %246 = vmatpush2.bf16.msra.mxu0 0
    %247 = vmatprep.subr.bf16.mxu0 0
    %248 = vmatpush2.bf16.msra.mxu0 0
    %249 = vmatprep.subr.bf16.mxu0 0
    %250 = vmatpush2.bf16.msra.mxu0 0
    %251 = vmatprep.subr.bf16.mxu0 0
    %252 = vmatpush2.bf16.msra.mxu0 0
    %253 = vmatprep.subr.bf16.mxu0 0
    %254 = vmatpush2.bf16.msra.mxu0 0
    %255 = vmatprep.subr.bf16.mxu0 0
    %256 = vmatpush2.bf16.msra.mxu0 0
    %257 = vmatprep.subr.bf16.mxu0 0
    %258 = vmatpush2.bf16.msra.mxu0 0
    %259 = vmatprep.subr.bf16.mxu0 0
    %260 = vmatpush2.bf16.msra.mxu0 0
    %261 = vmatprep.mubr.bf16.mxu0 0
    %262 = vmatmul.mubr.bf16.gmra.mxu0 %v165
    %v263 = vpop.f32.mrf.mxu0
    %v264 = vadd.f32 0.0, %v263
    %v265 = vpop.f32.mrf.mxu0
    %v266 = vpop.f32.mrf.mxu0
    %v267 = vadd.f32 0.0, %v266
    %v268 = vpop.f32.mrf.mxu0
    %269 = vmatprep.mubr.bf16.mxu0 0
    %270 = vmatmul.mubr.bf16.gmra.mxu0 %v166
    %v271 = vpop.f32.mrf.mxu0
    %v272 = vadd.f32 0.0, %v271
    %v273 = vpop.f32.mrf.mxu0
    %v274 = vpop.f32.mrf.mxu0
    %v275 = vadd.f32 0.0, %v274
    %v276 = vpop.f32.mrf.mxu0
    %277 = vmatprep.mubr.bf16.mxu0 0
    %278 = vmatmul.mubr.bf16.gmra.mxu0 %v167
    %v279 = vpop.f32.mrf.mxu0
    %v280 = vadd.f32 0.0, %v279
    %v281 = vpop.f32.mrf.mxu0
    %v282 = vpop.f32.mrf.mxu0
    %v283 = vadd.f32 0.0, %v282
    %v284 = vpop.f32.mrf.mxu0
    %285 = vmatprep.mubr.bf16.mxu0 0
    %286 = vmatmul.mubr.bf16.gmra.mxu0 %v168
    %v287 = vpop.f32.mrf.mxu0
    %v288 = vadd.f32 0.0, %v287
    %v289 = vpop.f32.mrf.mxu0
    %v290 = vpop.f32.mrf.mxu0
    %v291 = vadd.f32 0.0, %v290
    %v292 = vpop.f32.mrf.mxu0
    %293 = vmatprep.mubr.bf16.mxu0 0
    %294 = vmatmul.mubr.bf16.gmra.mxu0 %v169
    %v295 = vpop.f32.mrf.mxu0
    %v296 = vadd.f32 0.0, %v295
    %v297 = vpop.f32.mrf.mxu0
    %v298 = vpop.f32.mrf.mxu0
    %v299 = vadd.f32 0.0, %v298
    %v300 = vpop.f32.mrf.mxu0
    %301 = vmatprep.mubr.bf16.mxu0 0
    %302 = vmatmul.mubr.bf16.gmra.mxu0 %v170
    %v303 = vpop.f32.mrf.mxu0
    %v304 = vadd.f32 0.0, %v303
    %v305 = vpop.f32.mrf.mxu0
    %v306 = vpop.f32.mrf.mxu0
    %v307 = vadd.f32 0.0, %v306
    %v308 = vpop.f32.mrf.mxu0
    %309 = vmatprep.mubr.bf16.mxu0 0
    %310 = vmatmul.mubr.bf16.gmra.mxu0 %v171
    %v311 = vpop.f32.mrf.mxu0
    %v312 = vadd.f32 0.0, %v311
    %v313 = vpop.f32.mrf.mxu0
    %v314 = vpop.f32.mrf.mxu0
    %v315 = vadd.f32 0.0, %v314
    %v316 = vpop.f32.mrf.mxu0
    %317 = vmatprep.mubr.bf16.mxu0 0
    %318 = vmatmul.mubr.bf16.gmra.mxu0 %v172
    %v319 = vpop.f32.mrf.mxu0
    %v320 = vadd.f32 0.0, %v319
    %v321 = vpop.f32.mrf.mxu0
    %v322 = vpop.f32.mrf.mxu0
    %v323 = vadd.f32 0.0, %v322
    %v324 = vpop.f32.mrf.mxu0
    %325 = vdwg.mxu0
    %v326 = vadd.f32 %v101, %v264
    %v327 = vadd.f32 %v102, %v267
    %v328 = vadd.f32 %v103, %v272
    %v329 = vadd.f32 %v104, %v275
    %v330 = vadd.f32 %v105, %v280
    %v331 = vadd.f32 %v106, %v283
    %v332 = vadd.f32 %v107, %v288
    %v333 = vadd.f32 %v108, %v291
    %v334 = vadd.f32 %v109, %v296
    %v335 = vadd.f32 %v110, %v299
    %v336 = vadd.f32 %v111, %v304
    %v337 = vadd.f32 %v112, %v307
    %v338 = vadd.f32 %v113, %v312
    %v339 = vadd.f32 %v114, %v315
    %v340 = vadd.f32 %v115, %v320
    %v341 = vadd.f32 %v116, %v323
    %342 = vst [vmem:[#allocation2] sm:$0xff] %v326
    %343 = vst [vmem:[#allocation2 + $0x8] sm:$0xff] %v327
    %344 = vst [vmem:[#allocation2 + $0x10] sm:$0xff] %v328
    %345 = vst [vmem:[#allocation2 + $0x18] sm:$0xff] %v329
    %346 = vst [vmem:[#allocation2 + $0x20] sm:$0xff] %v330
    %347 = vst [vmem:[#allocation2 + $0x28] sm:$0xff] %v331
    %348 = vst [vmem:[#allocation2 + $0x30] sm:$0xff] %v332
    %349 = vst [vmem:[#allocation2 + $0x38] sm:$0xff] %v333
    %350 = vst [vmem:[#allocation2 + $0x40] sm:$0xff] %v334
    %351 = vst [vmem:[#allocation2 + $0x48] sm:$0xff] %v335
    %352 = vst [vmem:[#allocation2 + $0x50] sm:$0xff] %v336
    %353 = vst [vmem:[#allocation2 + $0x58] sm:$0xff] %v337
    %354 = vst [vmem:[#allocation2 + $0x60] sm:$0xff] %v338
    %355 = vst [vmem:[#allocation2 + $0x68] sm:$0xff] %v339
    %356 = vst [vmem:[#allocation2 + $0x70] sm:$0xff] %v340
    %357 = vst [vmem:[#allocation2 + $0x78] sm:$0xff] %v341
    // Predicated region
    $region34: #{tpu_custom_call.1} parent=1 // pred_check
      %p358 = pneg %p60
    $region35: #{tpu_custom_call.1} parent=1 // pred_check_branch
      %360 = sbr.rel (%p358) target = $region37
    $region36: #{tpu_custom_call.1} parent=1 // pred_region
      %v361 = vld [vmem:[#allocation2] sm:$0xff]
      %v362 = vld [vmem:[#allocation2 + $0x8] sm:$0xff]
      %v363 = vld [vmem:[#allocation2 + $0x10] sm:$0xff]
      %v364 = vld [vmem:[#allocation2 + $0x18] sm:$0xff]
      %v365 = vld [vmem:[#allocation2 + $0x20] sm:$0xff]
      %v366 = vld [vmem:[#allocation2 + $0x28] sm:$0xff]
      %v367 = vld [vmem:[#allocation2 + $0x30] sm:$0xff]
      %v368 = vld [vmem:[#allocation2 + $0x38] sm:$0xff]
      %v369 = vld [vmem:[#allocation2 + $0x40] sm:$0xff]
      %v370 = vld [vmem:[#allocation2 + $0x48] sm:$0xff]
      %v371 = vld [vmem:[#allocation2 + $0x50] sm:$0xff]
      %v372 = vld [vmem:[#allocation2 + $0x58] sm:$0xff]
      %v373 = vld [vmem:[#allocation2 + $0x60] sm:$0xff]
      %v374 = vld [vmem:[#allocation2 + $0x68] sm:$0xff]
      %v375 = vld [vmem:[#allocation2 + $0x70] sm:$0xff]
      %v376 = vld [vmem:[#allocation2 + $0x78] sm:$0xff]
      %v377 = vld [vmem:[%s2] sm:$0x1]
      %v379 = vlaneseq
      %v380 = vshrl.u32 %v379, 7
      %v381 = vsub.s32 0, %v380
      %v382 = vrot.slane %v377, %v381
      %v384 = vadd.f32 %v361, %v382
      %v385 = vadd.f32 %v362, %v382
      %v386 = vadd.f32 %v363, %v382
      %v387 = vadd.f32 %v364, %v382
      %v388 = vadd.f32 %v365, %v382
      %v389 = vadd.f32 %v366, %v382
      %v390 = vadd.f32 %v367, %v382
      %v391 = vadd.f32 %v368, %v382
      %v392 = vadd.f32 %v369, %v382
      %v393 = vadd.f32 %v370, %v382
      %v394 = vadd.f32 %v371, %v382
      %v395 = vadd.f32 %v372, %v382
      %v396 = vadd.f32 %v373, %v382
      %v397 = vadd.f32 %v374, %v382
      %v398 = vadd.f32 %v375, %v382
      %v399 = vadd.f32 %v376, %v382
      %v400 = vmax.f32 %v384, 0.0
      %v401 = vmax.f32 %v385, 0.0
      %v402 = vmax.f32 %v386, 0.0
      %v403 = vmax.f32 %v387, 0.0
      %v404 = vmax.f32 %v388, 0.0
      %v405 = vmax.f32 %v389, 0.0
      %v406 = vmax.f32 %v390, 0.0
      %v407 = vmax.f32 %v391, 0.0
      %v408 = vmax.f32 %v392, 0.0
      %v409 = vmax.f32 %v393, 0.0
      %v410 = vmax.f32 %v394, 0.0
      %v411 = vmax.f32 %v395, 0.0
      %v412 = vmax.f32 %v396, 0.0
      %v413 = vmax.f32 %v397, 0.0
      %v414 = vmax.f32 %v398, 0.0
      %v415 = vmax.f32 %v399, 0.0
      %v416 = vpack.c.bf16 %v401, %v400
      %v417 = vpack.c.bf16 %v403, %v402
      %v418 = vpack.c.bf16 %v405, %v404
      %v419 = vpack.c.bf16 %v407, %v406
      %v420 = vpack.c.bf16 %v409, %v408
      %v421 = vpack.c.bf16 %v411, %v410
      %v422 = vpack.c.bf16 %v413, %v412
      %v423 = vpack.c.bf16 %v415, %v414
      %v424 = vld [vmem:[#allocation8] sm:$0xf]
      %v425 = vld [vmem:[#allocation8 + $0x4] sm:$0xf]
      %v426 = vld [vmem:[#allocation8 + $0x8] sm:$0xf]
      %v427 = vld [vmem:[#allocation8 + $0xc] sm:$0xf]
      %v428 = vld [vmem:[#allocation8 + $0x10] sm:$0xf]
      %v429 = vld [vmem:[#allocation8 + $0x14] sm:$0xf]
      %v430 = vld [vmem:[#allocation8 + $0x18] sm:$0xf]
      %v431 = vld [vmem:[#allocation8 + $0x1c] sm:$0xf]
      %v432 = vld [vmem:[#allocation8 + $0x20] sm:$0xf]
      %v433 = vld [vmem:[#allocation8 + $0x24] sm:$0xf]
      %v434 = vld [vmem:[#allocation8 + $0x28] sm:$0xf]
      %v435 = vld [vmem:[#allocation8 + $0x2c] sm:$0xf]
      %v436 = vld [vmem:[#allocation8 + $0x30] sm:$0xf]
      %v437 = vld [vmem:[#allocation8 + $0x34] sm:$0xf]
      %v438 = vld [vmem:[#allocation8 + $0x38] sm:$0xf]
      %v439 = vld [vmem:[#allocation8 + $0x3c] sm:$0xf]
      %v456 = vunpack.c.l.b16 %v424
      %v457 = vunpack.c.l.b16 %v425
      %v458 = vunpack.c.l.b16 %v426
      %v459 = vunpack.c.l.b16 %v427
      %v460 = vunpack.c.l.b16 %v428
      %v461 = vunpack.c.l.b16 %v429
      %v462 = vunpack.c.l.b16 %v430
      %v463 = vunpack.c.l.b16 %v431
      %v464 = vunpack.c.l.b16 %v432
      %v465 = vunpack.c.l.b16 %v433
      %v466 = vunpack.c.l.b16 %v434
      %v467 = vunpack.c.l.b16 %v435
      %v468 = vunpack.c.l.b16 %v436
      %v469 = vunpack.c.l.b16 %v437
      %v470 = vunpack.c.l.b16 %v438
      %v471 = vunpack.c.l.b16 %v439
      %v472 = vpack.c.b16 %v457, %v456
      %v473 = vpack.c.b16 %v459, %v458
      %v474 = vpack.c.b16 %v461, %v460
      %v475 = vpack.c.b16 %v463, %v462
      %v476 = vpack.c.b16 %v465, %v464
      %v477 = vpack.c.b16 %v467, %v466
      %v478 = vpack.c.b16 %v469, %v468
      %v479 = vpack.c.b16 %v471, %v470
      %488 = vmatprep.subr.bf16.mxu0 0
      %489 = vmatpush1.bf16.msra.mxu0 %v479
      %490 = vmatprep.subr.bf16.mxu0 0
      %491 = vmatpush1.bf16.msra.mxu0 %v478
      %492 = vmatprep.subr.bf16.mxu0 0
      %493 = vmatpush1.bf16.msra.mxu0 %v477
      %494 = vmatprep.subr.bf16.mxu0 0
      %495 = vmatpush1.bf16.msra.mxu0 %v476
      %496 = vmatprep.subr.bf16.mxu0 0
      %497 = vmatpush1.bf16.msra.mxu0 %v475
      %498 = vmatprep.subr.bf16.mxu0 0
      %499 = vmatpush1.bf16.msra.mxu0 %v474
      %500 = vmatprep.subr.bf16.mxu0 0
      %501 = vmatpush1.bf16.msra.mxu0 %v473
      %502 = vmatprep.subr.bf16.mxu0 0
      %503 = vmatpush1.bf16.msra.mxu0 %v472
      %504 = vmatprep.subr.bf16.mxu0 0
      %505 = vmatpush2.bf16.msra.mxu0 0
      %506 = vmatprep.subr.bf16.mxu0 0
      %507 = vmatpush2.bf16.msra.mxu0 0
      %508 = vmatprep.subr.bf16.mxu0 0
      %509 = vmatpush2.bf16.msra.mxu0 0
      %510 = vmatprep.subr.bf16.mxu0 0
      %511 = vmatpush2.bf16.msra.mxu0 0
      %512 = vmatprep.subr.bf16.mxu0 0
      %513 = vmatpush2.bf16.msra.mxu0 0
      %514 = vmatprep.subr.bf16.mxu0 0
      %515 = vmatpush2.bf16.msra.mxu0 0
      %516 = vmatprep.subr.bf16.mxu0 0
      %517 = vmatpush2.bf16.msra.mxu0 0
      %518 = vmatprep.subr.bf16.mxu0 0
      %519 = vmatpush2.bf16.msra.mxu0 0
      %520 = vmatprep.mubr.bf16.mxu0 0
      %521 = vmatmul.mubr.bf16.gmra.mxu0 %v416
      %v522 = vpop.f32.mrf.mxu0
      %v523 = vadd.f32 0.0, %v522
      %v524 = vpop.f32.mrf.mxu0
      %v525 = vpop.f32.mrf.mxu0
      %v526 = vadd.f32 0.0, %v525
      %v527 = vpop.f32.mrf.mxu0
      %528 = vmatprep.mubr.bf16.mxu0 0
      %529 = vmatmul.mubr.bf16.gmra.mxu0 %v417
      %v530 = vpop.f32.mrf.mxu0
      %v531 = vadd.f32 0.0, %v530
      %v532 = vpop.f32.mrf.mxu0
      %v533 = vpop.f32.mrf.mxu0
      %v534 = vadd.f32 0.0, %v533
      %v535 = vpop.f32.mrf.mxu0
      %536 = vmatprep.mubr.bf16.mxu0 0
      %537 = vmatmul.mubr.bf16.gmra.mxu0 %v418
      %v538 = vpop.f32.mrf.mxu0
      %v539 = vadd.f32 0.0, %v538
      %v540 = vpop.f32.mrf.mxu0
      %v541 = vpop.f32.mrf.mxu0
      %v542 = vadd.f32 0.0, %v541
      %v543 = vpop.f32.mrf.mxu0
      %544 = vmatprep.mubr.bf16.mxu0 0
      %545 = vmatmul.mubr.bf16.gmra.mxu0 %v419
      %v546 = vpop.f32.mrf.mxu0
      %v547 = vadd.f32 0.0, %v546
      %v548 = vpop.f32.mrf.mxu0
      %v549 = vpop.f32.mrf.mxu0
      %v550 = vadd.f32 0.0, %v549
      %v551 = vpop.f32.mrf.mxu0
      %552 = vmatprep.mubr.bf16.mxu0 0
      %553 = vmatmul.mubr.bf16.gmra.mxu0 %v420
      %v554 = vpop.f32.mrf.mxu0
      %v555 = vadd.f32 0.0, %v554
      %v556 = vpop.f32.mrf.mxu0
      %v557 = vpop.f32.mrf.mxu0
      %v558 = vadd.f32 0.0, %v557
      %v559 = vpop.f32.mrf.mxu0
      %560 = vmatprep.mubr.bf16.mxu0 0
      %561 = vmatmul.mubr.bf16.gmra.mxu0 %v421
      %v562 = vpop.f32.mrf.mxu0
      %v563 = vadd.f32 0.0, %v562
      %v564 = vpop.f32.mrf.mxu0
      %v565 = vpop.f32.mrf.mxu0
      %v566 = vadd.f32 0.0, %v565
      %v567 = vpop.f32.mrf.mxu0
      %568 = vmatprep.mubr.bf16.mxu0 0
      %569 = vmatmul.mubr.bf16.gmra.mxu0 %v422
      %v570 = vpop.f32.mrf.mxu0
      %v571 = vadd.f32 0.0, %v570
      %v572 = vpop.f32.mrf.mxu0
      %v573 = vpop.f32.mrf.mxu0
      %v574 = vadd.f32 0.0, %v573
      %v575 = vpop.f32.mrf.mxu0
      %576 = vmatprep.mubr.bf16.mxu0 0
      %577 = vmatmul.mubr.bf16.gmra.mxu0 %v423
      %v578 = vpop.f32.mrf.mxu0
      %v579 = vadd.f32 0.0, %v578
      %v580 = vpop.f32.mrf.mxu0
      %v581 = vpop.f32.mrf.mxu0
      %v582 = vadd.f32 0.0, %v581
      %v583 = vpop.f32.mrf.mxu0
      %584 = vdwg.mxu0
      %v585 = vpack.c.bf16 %v526, %v523
      %v586 = vpack.c.bf16 %v534, %v531
      %v587 = vpack.c.bf16 %v542, %v539
      %v588 = vpack.c.bf16 %v550, %v547
      %v589 = vpack.c.bf16 %v558, %v555
      %v590 = vpack.c.bf16 %v566, %v563
      %v591 = vpack.c.bf16 %v574, %v571
      %v592 = vpack.c.bf16 %v582, %v579
      %v601 = vunpack.c.l.b16 %v585
      %v602 = vunpack.c.h.b16 %v585
      %v603 = vunpack.c.l.b16 %v586
      %v604 = vunpack.c.h.b16 %v586
      %v605 = vunpack.c.l.b16 %v587
      %v606 = vunpack.c.h.b16 %v587
      %v607 = vunpack.c.l.b16 %v588
      %v608 = vunpack.c.h.b16 %v588
      %v609 = vunpack.c.l.b16 %v589
      %v610 = vunpack.c.h.b16 %v589
      %v611 = vunpack.c.l.b16 %v590
      %v612 = vunpack.c.h.b16 %v590
      %v613 = vunpack.c.l.b16 %v591
      %v614 = vunpack.c.h.b16 %v591
      %v615 = vunpack.c.l.b16 %v592
      %v616 = vunpack.c.h.b16 %v592
      %v617 = vpack.c.b16 %v601, %v601
      %v618 = vpack.c.b16 %v602, %v602
      %v619 = vpack.c.b16 %v603, %v603
      %v620 = vpack.c.b16 %v604, %v604
      %v621 = vpack.c.b16 %v605, %v605
      %v622 = vpack.c.b16 %v606, %v606
      %v623 = vpack.c.b16 %v607, %v607
      %v624 = vpack.c.b16 %v608, %v608
      %v625 = vpack.c.b16 %v609, %v609
      %v626 = vpack.c.b16 %v610, %v610
      %v627 = vpack.c.b16 %v611, %v611
      %v628 = vpack.c.b16 %v612, %v612
      %v629 = vpack.c.b16 %v613, %v613
      %v630 = vpack.c.b16 %v614, %v614
      %v631 = vpack.c.b16 %v615, %v615
      %v632 = vpack.c.b16 %v616, %v616
      %649 = vst [vmem:[#allocation9] sm:$0xf] %v617
      %650 = vst [vmem:[#allocation9 + $0x4] sm:$0xf] %v618
      %651 = vst [vmem:[#allocation9 + $0x8] sm:$0xf] %v619
      %652 = vst [vmem:[#allocation9 + $0xc] sm:$0xf] %v620
      %653 = vst [vmem:[#allocation9 + $0x10] sm:$0xf] %v621
      %654 = vst [vmem:[#allocation9 + $0x14] sm:$0xf] %v622
      %655 = vst [vmem:[#allocation9 + $0x18] sm:$0xf] %v623
      %656 = vst [vmem:[#allocation9 + $0x1c] sm:$0xf] %v624
      %657 = vst [vmem:[#allocation9 + $0x20] sm:$0xf] %v625
      %658 = vst [vmem:[#allocation9 + $0x24] sm:$0xf] %v626
      %659 = vst [vmem:[#allocation9 + $0x28] sm:$0xf] %v627
      %660 = vst [vmem:[#allocation9 + $0x2c] sm:$0xf] %v628
      %661 = vst [vmem:[#allocation9 + $0x30] sm:$0xf] %v629
      %662 = vst [vmem:[#allocation9 + $0x34] sm:$0xf] %v630
      %663 = vst [vmem:[#allocation9 + $0x38] sm:$0xf] %v631
      %664 = vst [vmem:[#allocation9 + $0x3c] sm:$0xf] %v632
    $region37: #{tpu_custom_call.1} parent=1 // pred_fallthru
      _
    // Predicated region
    $region38: #{tpu_custom_call.1} parent=1 // pred_check
      _
    $region39: #{tpu_custom_call.1} parent=1 // pred_check_branch
      %666 = sbr.rel (0) target = $region41
    $region40: #{tpu_custom_call.1} parent=1 // pred_region
      %s668 = ssub.s32 1024, 1024
      %669 = vsyncadd [#allocation5], %s668
      %s670 = sshll.u32 [#allocation9], 4
      %s671 = int_to_ptr.vmem [resolvable:$true] %s670
      %676 = dma.vmem_to_hbm [thread:$0]  %s671, 1024, %s4, [#allocation5], 64, 64, 4
    $region41: #{tpu_custom_call.1} parent=1 // pred_fallthru
      _
    // Predicated region
    $region42: #{tpu_custom_call.1} parent=1 // pred_check
      _
    $region43: #{tpu_custom_call.1} parent=1 // pred_check_branch
      %678 = sbr.rel (0) target = $region45
    $region44: #{tpu_custom_call.1} parent=1 // pred_region
      %679 = dma.done [#allocation5], 1024
    $region45: #{tpu_custom_call.1} parent=1 // pred_fallthru
      _
    %680 = vsyncpa [#allocation4], 1
    %681 = vsyncpa [#allocation7], 1
    %682 = vsyncpa [#allocation5], 1

</llo_original>
